<compile_context>
chip_gen: v7x
topology: tpu7x:2x2x1
jax: 0.10.0
libtpu: 0.0.40
codegen_flags: <defaults>
</compile_context>

<pallas_src>
import random

import jax
import jax.numpy as jnp
from jax.experimental import pallas as pl
from jax.experimental.pallas import tpu as pltpu


# ----------------------------- Pallas kernel ------------------------------ #
def _p_ins_kernel(x_ref, wt_ref, b_ref, o_ref):
    # x_ref : (tm, D) row tile in its native (typically bf16) dtype
    # wt_ref: (D, D) bf16 weight, already transposed to (in, out) in __init__
    # b_ref : (1, D) f32 bias
    # o_ref : (tm, D) f32
    proj = jnp.dot(x_ref[...], wt_ref[...], preferred_element_type=jnp.float32)
    # torch `.float()` semantics: residual add in f32 (cast fused into the add)
    o_ref[...] = proj + x_ref[...].astype(jnp.float32) + b_ref[...]


def _choose_tm(R, *, target=1024, min_tiles=4):
    """Pick a row-tile size: multiple of 8, divides the (8-padded) row count,
    <= target, and leaving >= min_tiles grid steps when possible (so v7x gets
    at least 2 tiles per TensorCore and the DMA pipeline has depth)."""
    r8 = -(-R // 8) * 8
    divisors = [d for d in range(8, r8 + 1, 8) if r8 % d == 0]
    good = [d for d in divisors if d <= target and r8 // d >= min_tiles]
    if good:
        return max(good)
    small = [d for d in divisors if d <= target]
    if small:
        return max(small)
    return min(divisors)


def p_ins_pallas(feats_lmd, wt, b2):
    """feats_lmd: (L, M, D) any float dtype (kept native, e.g. bf16);
    wt: (D, D) bf16 weight in (in, out) layout (pre-transposed);
    b2: (1, D) f32 bias.
    Returns f32 (L, M, D) = x.float() + x.float() @ W.T + b."""
    L, M, D = feats_lmd.shape
    R = L * M
    x2 = feats_lmd.reshape(R, D)                 # fold L into rows; W, b shared

    tm = _choose_tm(R)
    n_tiles = pl.cdiv(R, tm)
    r_pad = n_tiles * tm
    if r_pad != R:
        # Fallback only when R is not a multiple of 8; the demo hits r_pad == R
        # so there is no pad/slice HBM round trip.
        x2 = jnp.pad(x2, ((0, r_pad - R), (0, 0)))

    in_bytes = jnp.dtype(x2.dtype).itemsize
    w_bytes = jnp.dtype(wt.dtype).itemsize
    # actual VMEM footprint: 2x in tile + 2x out tile (f32) + weight + bias
    vmem_need = (2 * tm * D * in_bytes + 2 * tm * D * 4
                 + D * D * w_bytes + D * 4)
    vmem_limit = min(max(32 * 1024 * 1024, 2 * vmem_need), 64 * 1024 * 1024)

    cost = pl.CostEstimate(
        flops=2 * r_pad * D * D + 2 * r_pad * D,
        transcendentals=0,
        bytes_accessed=r_pad * D * in_bytes + D * D * w_bytes + D * 4
                       + r_pad * D * 4,
    )

    out = pl.pallas_call(
        _p_ins_kernel,
        out_shape=jax.ShapeDtypeStruct((r_pad, D), jnp.float32),
        grid_spec=pltpu.PrefetchScalarGridSpec(
            num_scalar_prefetch=0,
            grid=(n_tiles,),
            in_specs=[
                # row tile, pipelined (default double-buffered)
                pl.BlockSpec((tm, D), lambda i: (i, 0)),
                # weight + bias: constant index_map -> single-buffer (save VMEM)
                pl.BlockSpec((D, D), lambda i: (0, 0),
                             pipeline_mode=pl.Buffered(1)),
                pl.BlockSpec((1, D), lambda i: (0, 0),
                             pipeline_mode=pl.Buffered(1)),
            ],
            out_specs=pl.BlockSpec((tm, D), lambda i: (i, 0)),
        ),
        compiler_params=pltpu.CompilerParams(
            dimension_semantics=("parallel",),             # megacore on v7x
            vmem_limit_bytes=vmem_limit,
        ),
        cost_estimate=cost,
    )(x2, wt, b2)

    if r_pad != R:
        out = out[:R]
    return out.reshape(L, M, D)


# --------------------------- PromptLearner (JAX) --------------------------- #
class PromptLearnerJAX:
    def __init__(self, key, classnames, info_topo, *, n_set, n_tpro, ctx_dim,
                 layers, vocab_size, seq_len, dtype=jnp.float32):
        self.n_set = n_set
        self.n_tpro = n_tpro
        self.ctx_dim = ctx_dim
        self.layers = layers
        self.vocab_size = vocab_size
        self.seq_len = seq_len
        self.dtype = dtype

        ks = jax.random.split(key, layers + 4)
        # global prompt: (layers-1) params of shape (n_tpro, ctx_dim), N(0, 0.02)
        self.global_prompt = tuple(
            (0.02 * jax.random.normal(ks[i], (n_tpro, ctx_dim))).astype(dtype)
            for i in range(layers - 1)
        )
        # p_ins_projector = nn.Linear(ctx_dim, ctx_dim): W (out, in), b (out,), f32
        self.p_ins_w = 0.02 * jax.random.normal(ks[layers - 1], (ctx_dim, ctx_dim))
        self.p_ins_b = 0.02 * jax.random.normal(ks[layers], (ctx_dim,))
        # hoisted, one-time kernel-layout copies (review: no per-forward transpose)
        self._p_ins_wt = jnp.transpose(self.p_ins_w).astype(jnp.bfloat16)  # (in,out)
        self._p_ins_b2 = self.p_ins_b.reshape(1, ctx_dim).astype(jnp.float32)
        # p_input: (n_tpro + n_set, ctx_dim)
        self.p_input = (0.02 * jax.random.normal(
            ks[layers + 1], (n_tpro + n_set, ctx_dim))).astype(dtype)
        # synthetic CLIP token embedding table
        # TODO(synk): real clip.tokenize + clip_model.token_embedding replaced by a
        # deterministic hash tokenizer + synthetic embedding table (no checkpoint).
        self.token_embedding = (0.02 * jax.random.normal(
            ks[layers + 2], (vocab_size, ctx_dim))).astype(dtype)

        self.classnames = [name.replace('_', ' ') for name in classnames]
        self.info_topo = info_topo
        self.n_cls = len(classnames)

    # deterministic stand-in for clip.tokenize(p, truncate=True)
    def _tokenize(self, prompt):
        words = prompt.split()
        ids = [1 + (sum(ord(c) for c in w) % (self.vocab_size - 2)) for w in words]
        ids = ids[: self.seq_len]
        ids = ids + [0] * (self.seq_len - len(ids))
        return jnp.asarray(ids, dtype=jnp.int32)

    def forward(self, feats, attns, flag):
        p_uni = self.global_prompt
        prompts, attn = [], []
        prompt_prefix = ' '.join(['X'] * (self.n_tpro + self.n_set))

        if flag:
            for name in self.classnames:
                idx = random.randint(0, self.n_set - 1)
                topo = self.info_topo[name][idx]
                p = (prompt_prefix + ' ' + name + '. '
                     + ', '.join(topo['Entities']) + '. '
                     + ', '.join(topo['Attributes']) + '.')
                attn.append(attns[name][:, idx])
                prompts.append(p)
        else:
            for name in self.classnames:
                for idx in range(self.n_set):
                    topo = self.info_topo[name][idx]
                    p = (prompt_prefix + ' ' + name + '. '
                         + ', '.join(topo['Entities']) + '. '
                         + ', '.join(topo['Attributes']) + '.')
                    attn.append(attns[name][:, idx])
                    prompts.append(p)

        attn = jnp.stack(attn, axis=0)

        tokenized = jnp.stack([self._tokenize(p) for p in prompts], axis=0)
        embedding = self.token_embedding[tokenized].astype(self.dtype)  # (P, S, D)

        n_p = len(prompts)
        p_input = jnp.broadcast_to(
            self.p_input[None], (n_p, self.n_tpro + self.n_set, self.ctx_dim))
        prefix = embedding[:, :1]
        suffix = embedding[:, 1 + self.n_tpro + self.n_set:]
        p_ori = jnp.concatenate([prefix, p_input, suffix], axis=1)

        # ------- hot path: per-layer residual linear projection (Pallas) ------
        l, c, n, d = feats.shape
        feats_lmd = feats.reshape(l, c * n, d)[: self.layers - 1]   # native dtype
        p_ins = p_ins_pallas(feats_lmd, self._p_ins_wt, self._p_ins_b2)

        return p_ori, p_ins, p_uni, attn


# --------------------------------- main ------------------------------------ #
if __name__ == "__main__":
    random.seed(0)
    key = jax.random.PRNGKey(0)

    # small, forward-consistent shapes (D lane-dense at 128)
    n_set, n_tpro = 2, 4
    ctx_dim = 128
    layers = 4                 # => layers-1 = 3 layers of feats / global prompts
    n_tokens = 64              # tokens per class-description (rows = 3*4*64 = 768)
    seq_len = 16
    vocab_size = 64
    classnames = ["dog_breed", "cat"]

    info_topo = {
        "dog breed": [
            {"Entities": ["snout", "tail"], "Attributes": ["furry", "loyal"]},
            {"Entities": ["paws", "ears"], "Attributes": ["playful", "fast"]},
        ],
        "cat": [
            {"Entities": ["whiskers", "claws"], "Attributes": ["agile", "quiet"]},
            {"Entities": ["tail", "eyes"], "Attributes": ["curious", "soft"]},
        ],
    }

    k_feats, k_attn1, k_attn2 = jax.random.split(key, 3)
    # feats: (l, c, n, d) with l = layers-1, c = n_cls * n_set, n = tokens.
    # Kept in bf16 in HBM (CLIP half dtype); the kernel accumulates in f32.
    feats = jax.random.normal(
        k_feats, (layers - 1, len(classnames) * n_set, n_tokens, ctx_dim),
        dtype=jnp.bfloat16)
    attns = {
        "dog breed": jax.random.normal(k_attn1, (8, n_set), dtype=jnp.float32),
        "cat": jax.random.normal(k_attn2, (8, n_set), dtype=jnp.float32),
    }

    learner = PromptLearnerJAX(
        jax.random.PRNGKey(42), classnames, info_topo,
        n_set=n_set, n_tpro=n_tpro, ctx_dim=ctx_dim, layers=layers,
        vocab_size=vocab_size, seq_len=seq_len, dtype=jnp.bfloat16)

    p_ori, p_ins, p_uni, attn = learner.forward(feats, attns, flag=False)
    jax.block_until_ready((p_ori, p_ins, attn))

    # correctness check of the Pallas hot path against pure JAX (f32 reference)
    l, c, n, d = feats.shape
    x = feats.reshape(l, c * n, d).astype(jnp.float32)
    ref = x + jnp.einsum("lmd,od->lmo", x, learner.p_ins_w) + learner.p_ins_b
    assert p_ins.shape == (layers - 1, c * n, ctx_dim)
    assert p_ins.dtype == jnp.float32
    assert p_ori.shape == (len(classnames) * n_set, seq_len, ctx_dim)
    assert attn.shape == (len(classnames) * n_set, 8)
    # tolerance covers bf16 weight / bf16 MXU operand pass (same numerics as
    # the previous default-precision f32 version)
    assert jnp.allclose(p_ins, ref, atol=2e-2, rtol=2e-2)

    print("KERNEL_OK")
</pallas_src>

<mosaic_0001>
module attributes {stable_mosaic.version = 11 : i64} {
  func.func @_p_ins_kernel(%arg0: i32, %arg1: memref<192x128xbf16, #tpu.memory_space<vmem>>, %arg2: memref<128x128xbf16, #tpu.memory_space<vmem>>, %arg3: memref<1x128xf32, #tpu.memory_space<vmem>>, %arg4: memref<192x128xf32, #tpu.memory_space<vmem>>) attributes {dimension_semantics = [#tpu.dimension_semantics<parallel>], iteration_bounds = array<i64: 4>, scalar_prefetch = 0 : i64, scratch_operands = 0 : i64, tpu.core_type = #tpu.core_type<tc>, window_params = [{transform_indices = @transform_0, window_bounds = array<i64: 192, 128>}, {pipeline_mode = #tpu.pipeline_mode<synchronous>, transform_indices = @transform_1, window_bounds = array<i64: 128, 128>}, {pipeline_mode = #tpu.pipeline_mode<synchronous>, transform_indices = @transform_2, window_bounds = array<i64: 1, 128>}, {transform_indices = @transform_3, window_bounds = array<i64: 192, 128>}]} {
    %c0 = arith.constant 0 : index
    %c0_0 = arith.constant 0 : index
    %0 = vector.load %arg1[%c0, %c0_0] : memref<192x128xbf16, #tpu.memory_space<vmem>>, vector<192x128xbf16>
    %c0_1 = arith.constant 0 : index
    %c0_2 = arith.constant 0 : index
    %1 = vector.load %arg2[%c0_1, %c0_2] : memref<128x128xbf16, #tpu.memory_space<vmem>>, vector<128x128xbf16>
    %cst = arith.constant dense<0.000000e+00> : vector<192x128xf32>
    %2 = tpu.matmul %0, %1, %cst {dimension_numbers = #tpu.dot_dimension_numbers<[1], [0], [0], [1], [0, 0, 1, 1], [], []>} : vector<192x128xbf16>, vector<128x128xbf16>, vector<192x128xf32> -> vector<192x128xf32>
    %c0_3 = arith.constant 0 : index
    %c0_4 = arith.constant 0 : index
    %3 = vector.load %arg1[%c0_3, %c0_4] : memref<192x128xbf16, #tpu.memory_space<vmem>>, vector<192x128xbf16>
    %4 = arith.extf %3 : vector<192x128xbf16> to vector<192x128xf32>
    %5 = arith.addf %2, %4 : vector<192x128xf32>
    %c0_5 = arith.constant 0 : index
    %c0_6 = arith.constant 0 : index
    %6 = vector.load %arg3[%c0_5, %c0_6] : memref<1x128xf32, #tpu.memory_space<vmem>>, vector<1x128xf32>
    %7 = vector.broadcast %6 : vector<1x128xf32> to vector<192x128xf32>
    %8 = arith.addf %5, %7 : vector<192x128xf32>
    %c0_7 = arith.constant 0 : index
    %c0_8 = arith.constant 0 : index
    %9 = vector.load %arg4[%c0_7, %c0_8] : memref<192x128xf32, #tpu.memory_space<vmem>>, vector<192x128xf32>
    tpu.vector_store %arg4[%c0_7, %c0_8], %8 {strides = array<i32>} : memref<192x128xf32, #tpu.memory_space<vmem>>, vector<192x128xf32>,
    return
  }
  func.func @transform_0(%arg0: i32) -> (i32, i32) {
    %c0_i32 = arith.constant 0 : i32
    %c0_i32_0 = arith.constant 0 : i32
    return %arg0, %c0_i32 : i32, i32
  }
  func.func @transform_1(%arg0: i32) -> (i32, i32) {
    %c0_i32 = arith.constant 0 : i32
    %c0_i32_0 = arith.constant 0 : i32
    %c0_i32_1 = arith.constant 0 : i32
    return %c0_i32, %c0_i32_0 : i32, i32
  }
  func.func @transform_2(%arg0: i32) -> (i32, i32) {
    %c0_i32 = arith.constant 0 : i32
    %c0_i32_0 = arith.constant 0 : i32
    %c0_i32_1 = arith.constant 0 : i32
    return %c0_i32, %c0_i32_0 : i32, i32
  }
  func.func @transform_3(%arg0: i32) -> (i32, i32) {
    %c0_i32 = arith.constant 0 : i32
    %c0_i32_0 = arith.constant 0 : i32
    return %arg0, %c0_i32 : i32, i32
  }
}

</mosaic_0001>

<llo_original>
// kernel: tpu_custom_call.1
$region0: #{tpu_custom_call.1}
  #allocation0 [shape = 'u32[]', space=smem, size = 0x4, offset = 0x4, fixed_abs, tag = 'smem constant byte address 0x4 - core index']
  #allocation1 [shape = 'u32[144,128]{1,0:T(1,128)}', space=vmem, size = 0x12000, scoped, tag = 'internal scratch']
  %s0 = inlined_call_operand.hbm [shape: bf16[768,128], index: 0, kind: input, shape index: {}]
  %s1 = inlined_call_operand.hbm [shape: bf16[128,128], index: 1, kind: input, shape index: {}]
  %s2 = inlined_call_operand.vmem [shape: f32[1,128], index: 2, kind: input, shape index: {}]
  %s3 = inlined_call_operand.hbm [shape: f32[768,128], index: 3, kind: output, shape index: {}]
  %s4 = sld [smem:[#allocation0]]
  $region53: #{tpu_custom_call.1} parent=0
    _
  %s6 = ssub.s32 1, %s4
  %s7 = scalar_select 0, %s6, %s4
  $region1: #{tpu_custom_call.1} parent=0
    #allocation2 [shape = 'u8[98304]{0}', space=vmem, size = 0x18000, scoped, tag = 'input window, operand 0']
    #allocation3 [shape = 's32[2]{0}', space=sflag, size = 0x8, scoped, tag = 'scoped memory for tpu_custom_call.1']
    #allocation4 [shape = 's32[2]{0}', space=sflag, size = 0x8, scoped, tag = 'scoped memory for tpu_custom_call.1']
    #allocation5 [shape = 'u8[32768]{0}', space=vmem, size = 0x8000, scoped, tag = 'input window, operand 1, single buffered']
    #allocation6 [shape = 's32[1]{0}', space=sflag, size = 0x4, scoped, tag = 'scoped memory for tpu_custom_call.1']
    #allocation7 [shape = 'u8[196608]{0}', space=vmem, size = 0x30000, scoped, tag = 'output window, operand 0']
    %8 = vsyncpa [#allocation3], 0
    %s9 = scalar_lea.sflag [#allocation3], 1
    %10 = vsyncpa %s9, 0
    %11 = vsyncpa [#allocation6], 0
    %12 = vsyncpa [#allocation4], 0
    %s13 = scalar_lea.sflag [#allocation4], 1
    %14 = vsyncpa %s13, 0
    loop: start=0, step=1, limit=6
    $region2: #{tpu_custom_call.1} parent=1 // loop_pre_header
      _
    $region3: #{tpu_custom_call.1} parent=1 // loop_header
      %s16 = sphi 0, %s20
      %p17 = scmp.ge.s32.totalorder %s16, 6
      %s26 = sphi 0, %s28
      %s29 = sphi 0, %s26
      %s30 = sphi 0, %s29
      %s46 = sphi 0, %s30
      %s50 = sphi 0, %s50
      %s52 = sphi 0, %s50
      %s53 = sphi 0, %s52
      %s67 = sphi 0, %s53
      %s71 = sphi 0, %s71
      %s73 = sphi 0, %s71
      %s74 = sphi 0, %s73
      %s88 = sphi 0, %s74
      %s94 = sphi 0, %s96
      %s97 = sphi 0, %s94
      %s98 = sphi 0, %s97
      %s114 = sphi 0, %s98
    $region4: #{tpu_custom_call.1} parent=1 // loop_header_branch
      %19 = sbr.rel (%p17) target = $region8
    $region5: #{tpu_custom_call.1} parent=1 // loop_body
      %s21 = ssub.s32 %s16, 1
      %s22 = ssub.s32 %s16, 2
      %s23 = sadd.s32 %s16, 1
      %s24 = ssub.s32 %s16, %s23
      %p25 = scmp.eq.s32.totalorder %s24, 0
      %s27 = sadd.s32 %s26, 1
      %s28 = scalar_select %p25, %s26, %s27
      %p31 = pneg %p25
      %p32 = scmp.eq.s32.totalorder %s16, 3
      %p33 = por %p31, %p32
      %p34 = scmp.ne.s32.totalorder %s26, %s29
      %p35 = scmp.eq.s32.totalorder %s16, 0
      %p36 = por %p34, %p35
      %p37 = scmp.ne.s32.totalorder %s26, %s29
      %p38 = scmp.eq.s32.totalorder %s21, 3
      %p39 = por %p37, %p38
      %p40 = scmp.ne.s32.totalorder %s29, %s30
      %p41 = scmp.eq.s32.totalorder %s21, 0
      %p42 = por %p40, %p41
      %p43 = scmp.ne.s32.totalorder %s29, %s30
      %p44 = scmp.eq.s32.totalorder %s22, 3
      %p45 = por %p43, %p44
      %p47 = scmp.ne.s32.totalorder %s30, %s46
      %p48 = scmp.eq.s32.totalorder %s22, 0
      %p49 = por %p47, %p48
      %s51 = sadd.s32 %s50, 1
      %p54 = scmp.eq.s32.totalorder %s16, 3
      %p55 = scmp.ne.s32.totalorder %s50, %s52
      %p56 = scmp.eq.s32.totalorder %s16, 0
      %p57 = por %p55, %p56
      %p58 = scmp.ne.s32.totalorder %s50, %s52
      %p59 = scmp.eq.s32.totalorder %s21, 3
      %p60 = por %p58, %p59
      %p61 = scmp.ne.s32.totalorder %s52, %s53
      %p62 = scmp.eq.s32.totalorder %s21, 0
      %p63 = por %p61, %p62
      %p64 = scmp.ne.s32.totalorder %s52, %s53
      %p65 = scmp.eq.s32.totalorder %s22, 3
      %p66 = por %p64, %p65
      %p68 = scmp.ne.s32.totalorder %s53, %s67
      %p69 = scmp.eq.s32.totalorder %s22, 0
      %p70 = por %p68, %p69
      %s72 = sadd.s32 %s71, 1
      %p75 = scmp.eq.s32.totalorder %s16, 3
      %p76 = scmp.ne.s32.totalorder %s71, %s73
      %p77 = scmp.eq.s32.totalorder %s16, 0
      %p78 = por %p76, %p77
      %p79 = scmp.ne.s32.totalorder %s71, %s73
      %p80 = scmp.eq.s32.totalorder %s21, 3
      %p81 = por %p79, %p80
      %p82 = scmp.ne.s32.totalorder %s73, %s74
      %p83 = scmp.eq.s32.totalorder %s21, 0
      %p84 = por %p82, %p83
      %p85 = scmp.ne.s32.totalorder %s73, %s74
      %p86 = scmp.eq.s32.totalorder %s22, 3
      %p87 = por %p85, %p86
      %p89 = scmp.ne.s32.totalorder %s74, %s88
      %p90 = scmp.eq.s32.totalorder %s22, 0
      %p91 = por %p89, %p90
      %s92 = ssub.s32 %s16, %s23
      %p93 = scmp.eq.s32.totalorder %s92, 0
      %s95 = sadd.s32 %s94, 1
      %s96 = scalar_select %p93, %s94, %s95
      %p99 = pneg %p93
      %p100 = scmp.eq.s32.totalorder %s16, 3
      %p101 = por %p99, %p100
      %p102 = scmp.ne.s32.totalorder %s94, %s97
      %p103 = scmp.eq.s32.totalorder %s16, 0
      %p104 = por %p102, %p103
      %p105 = scmp.ne.s32.totalorder %s94, %s97
      %p106 = scmp.eq.s32.totalorder %s21, 3
      %p107 = por %p105, %p106
      %p108 = scmp.ne.s32.totalorder %s97, %s98
      %p109 = scmp.eq.s32.totalorder %s21, 0
      %p110 = por %p108, %p109
      %p111 = scmp.ne.s32.totalorder %s97, %s98
      %p112 = scmp.eq.s32.totalorder %s22, 3
      %p113 = por %p111, %p112
      %p115 = scmp.ne.s32.totalorder %s98, %s114
      %p116 = scmp.eq.s32.totalorder %s22, 0
      %p117 = por %p115, %p116
      %p118 = scmp.le.s32.totalorder 1, %s16
      %p119 = scmp.lt.s32.totalorder %s16, 5
      %p120 = pnand %p118, %p119
      %p121 = pneg %p120
      // Predicated region
      $region9: #{tpu_custom_call.1} parent=5 // pred_check
        _
      $region10: #{tpu_custom_call.1} parent=5 // pred_check_branch
        %123 = sbr.rel (%p120) target = $region12
      $region11: #{tpu_custom_call.1} parent=5 // pred_region
        %s124 = ssub.s32 %s16, 1
        // Predicated region
        $region13: #{tpu_custom_call.1} parent=11 // pred_check
          %p125 = pneg %p63
        $region14: #{tpu_custom_call.1} parent=11 // pred_check_branch
          %127 = sbr.rel (%p125) target = $region16
        $region15: #{tpu_custom_call.1} parent=11 // pred_region
          %s129 = ssub.s32 1024, 1024
          %130 = vsyncadd [#allocation6], %s129
          %s131 = sshll.u32 [#allocation5], 4
          %s132 = int_to_ptr.vmem [resolvable:$true] %s131
          %137 = dma.hbm_to_vmem [thread:$0]  %s1, 1024, %s132, [#allocation6], 64, 64, 4
        $region16: #{tpu_custom_call.1} parent=11 // pred_fallthru
          _
        // Predicated region
        $region17: #{tpu_custom_call.1} parent=11 // pred_check
          %p138 = pneg %p84
        $region18: #{tpu_custom_call.1} parent=11 // pred_check_branch
          %140 = sbr.rel (%p138) target = $region20
        $region19: #{tpu_custom_call.1} parent=11 // pred_region
          _
        $region20: #{tpu_custom_call.1} parent=11 // pred_fallthru
          _
      $region12: #{tpu_custom_call.1} parent=5 // pred_fallthru
        _
      %p141 = scmp.lt.s32.totalorder %s16, 4
      // Predicated region
      $region21: #{tpu_custom_call.1} parent=5 // pred_check
        %p142 = pneg %p141
      $region22: #{tpu_custom_call.1} parent=5 // pred_check_branch
        %144 = sbr.rel (%p142) target = $region24
      $region23: #{tpu_custom_call.1} parent=5 // pred_region
        // Predicated region
        $region25: #{tpu_custom_call.1} parent=23 // pred_check
          %p145 = pneg %p36
        $region26: #{tpu_custom_call.1} parent=23 // pred_check_branch
          %147 = sbr.rel (%p145) target = $region28
        $region27: #{tpu_custom_call.1} parent=23 // pred_region
          %s148 = sand.u32 %s26, 1
          %s149 = scalar_lea.sflag [#allocation3], %s148
          %s150 = sand.u32 %s26, 1
          %s151 = smul.addr %s150, 96
          %s152 = scalar_lea.vmem [#allocation2], %s151
          %s153 = smul.u32 24, %s16
          %s155 = ssub.s32 1536, 1536
          %156 = vsyncadd %s149, %s155
          %s157 = smul.addr %s153, 64
          %s158 = scalar_lea.hbm %s0, %s157
          %s159 = sshll.u32 %s152, 4
          %s160 = int_to_ptr.vmem [resolvable:$true] %s159
          %165 = dma.hbm_to_vmem [thread:$0]  %s158, 1536, %s160, %s149, 64, 64, 4
        $region28: #{tpu_custom_call.1} parent=23 // pred_fallthru
          _
      $region24: #{tpu_custom_call.1} parent=5 // pred_fallthru
        _
      %p166 = scmp.le.s32.totalorder 1, %s16
      %p167 = scmp.lt.s32.totalorder %s16, 5
      %p168 = pnand %p166, %p167
      %p169 = pneg %p168
      // Predicated region
      $region29: #{tpu_custom_call.1} parent=5 // pred_check
        _
      $region30: #{tpu_custom_call.1} parent=5 // pred_check_branch
        %171 = sbr.rel (%p168) target = $region32
      $region31: #{tpu_custom_call.1} parent=5 // pred_region
        %s172 = ssub.s32 %s16, 1
        %s173 = sand.u32 %s29, 1
        %s174 = scalar_lea.sflag [#allocation3], %s173
        %s175 = sand.u32 %s29, 1
        %s176 = smul.addr %s175, 96
        %s177 = scalar_lea.vmem [#allocation2], %s176
        // Predicated region
        $region33: #{tpu_custom_call.1} parent=31 // pred_check
          %p178 = pneg %p42
        $region34: #{tpu_custom_call.1} parent=31 // pred_check_branch
          %180 = sbr.rel (%p178) target = $region36
        $region35: #{tpu_custom_call.1} parent=31 // pred_region
          %181 = dma.done %s174, 1536
        $region36: #{tpu_custom_call.1} parent=31 // pred_fallthru
          _
        // Predicated region
        $region37: #{tpu_custom_call.1} parent=31 // pred_check
          %p182 = pneg %p63
        $region38: #{tpu_custom_call.1} parent=31 // pred_check_branch
          %184 = sbr.rel (%p182) target = $region40
        $region39: #{tpu_custom_call.1} parent=31 // pred_region
          %185 = dma.done [#allocation6], 1024
        $region40: #{tpu_custom_call.1} parent=31 // pred_fallthru
          _
        %s186 = sand.u32 %s29, 1
        %s187 = scalar_lea.sflag [#allocation3], %s186
        %s188 = sand.u32 %s29, 1
        %s189 = smul.addr %s188, 96
        %s190 = scalar_lea.vmem [#allocation2], %s189
        %p191 = pneg %p42
        %p192 = pneg %p39
        %p193 = pneg %p63
        %p194 = pneg %p60
        %p195 = pneg %p84
        %p196 = pneg %p81
        %p197 = pneg %p110
        %p198 = pneg %p107
        %s199 = sand.u32 %s97, 1
        %s200 = scalar_lea.sflag [#allocation4], %s199
        %s201 = sand.u32 %s97, 1
        %s202 = smul.addr %s201, 192
        %s203 = scalar_lea.vmem [#allocation7], %s202
        %s204 = smul.u32 24, %s21
        %s205 = smul.u32 24, %s21
        %v207 = vld [vmem:[%s177] sm:$0xf]
        %v208 = vld [vmem:[%s177 + $0x4] sm:$0xf]
        %v209 = vld [vmem:[%s177 + $0x8] sm:$0xf]
        %v210 = vld [vmem:[%s177 + $0xc] sm:$0xf]
        %v211 = vld [vmem:[%s177 + $0x10] sm:$0xf]
        %v212 = vld [vmem:[%s177 + $0x14] sm:$0xf]
        %v213 = vld [vmem:[%s177 + $0x18] sm:$0xf]
        %v214 = vld [vmem:[%s177 + $0x1c] sm:$0xf]
        %v215 = vld [vmem:[%s177 + $0x20] sm:$0xf]
        %v216 = vld [vmem:[%s177 + $0x24] sm:$0xf]
        %v217 = vld [vmem:[%s177 + $0x28] sm:$0xf]
        %v218 = vld [vmem:[%s177 + $0x2c] sm:$0xf]
        %v219 = vld [vmem:[%s177 + $0x30] sm:$0xf]
        %v220 = vld [vmem:[%s177 + $0x34] sm:$0xf]
        %v221 = vld [vmem:[%s177 + $0x38] sm:$0xf]
        %v222 = vld [vmem:[%s177 + $0x3c] sm:$0xf]
        %v223 = vld [vmem:[%s177 + $0x40] sm:$0xf]
        %v224 = vld [vmem:[%s177 + $0x44] sm:$0xf]
        %v225 = vld [vmem:[%s177 + $0x48] sm:$0xf]
        %v226 = vld [vmem:[%s177 + $0x4c] sm:$0xf]
        %v227 = vld [vmem:[%s177 + $0x50] sm:$0xf]
        %v228 = vld [vmem:[%s177 + $0x54] sm:$0xf]
        %v229 = vld [vmem:[%s177 + $0x58] sm:$0xf]
        %v230 = vld [vmem:[%s177 + $0x5c] sm:$0xf]
        %v231 = vld [vmem:[#allocation5] sm:$0xf]
        %v232 = vld [vmem:[#allocation5 + $0x4] sm:$0xf]
        %v233 = vld [vmem:[#allocation5 + $0x8] sm:$0xf]
        %v234 = vld [vmem:[#allocation5 + $0xc] sm:$0xf]
        %v235 = vld [vmem:[#allocation5 + $0x10] sm:$0xf]
        %v236 = vld [vmem:[#allocation5 + $0x14] sm:$0xf]
        %v237 = vld [vmem:[#allocation5 + $0x18] sm:$0xf]
        %v238 = vld [vmem:[#allocation5 + $0x1c] sm:$0xf]
        %v239 = vld [vmem:[#allocation5 + $0x20] sm:$0xf]
        %v240 = vld [vmem:[#allocation5 + $0x24] sm:$0xf]
        %v241 = vld [vmem:[#allocation5 + $0x28] sm:$0xf]
        %v242 = vld [vmem:[#allocation5 + $0x2c] sm:$0xf]
        %v243 = vld [vmem:[#allocation5 + $0x30] sm:$0xf]
        %v244 = vld [vmem:[#allocation5 + $0x34] sm:$0xf]
        %v245 = vld [vmem:[#allocation5 + $0x38] sm:$0xf]
        %v246 = vld [vmem:[#allocation5 + $0x3c] sm:$0xf]
        %v247 = vunpack.c.l.bf16 %v207
        %v248 = vunpack.c.l.bf16 %v208
        %v249 = vunpack.c.l.bf16 %v209
        %v250 = vunpack.c.l.bf16 %v210
        %v251 = vunpack.c.l.bf16 %v211
        %v252 = vunpack.c.l.bf16 %v212
        %v253 = vunpack.c.l.bf16 %v213
        %v254 = vunpack.c.l.bf16 %v214
        %v255 = vunpack.c.l.bf16 %v215
        %v256 = vunpack.c.l.bf16 %v216
        %v257 = vunpack.c.l.bf16 %v217
        %v258 = vunpack.c.l.bf16 %v218
        %v259 = vunpack.c.l.bf16 %v219
        %v260 = vunpack.c.l.bf16 %v220
        %v261 = vunpack.c.l.bf16 %v221
        %v262 = vunpack.c.l.bf16 %v222
        %v263 = vunpack.c.l.bf16 %v223
        %v264 = vunpack.c.l.bf16 %v224
        %v265 = vunpack.c.l.bf16 %v225
        %v266 = vunpack.c.l.bf16 %v226
        %v267 = vunpack.c.l.bf16 %v227
        %v268 = vunpack.c.l.bf16 %v228
        %v269 = vunpack.c.l.bf16 %v229
        %v270 = vunpack.c.l.bf16 %v230
        %v295 = vunpack.c.l.b16 %v207
        %v296 = vunpack.c.l.b16 %v208
        %v297 = vunpack.c.l.b16 %v209
        %v298 = vunpack.c.l.b16 %v210
        %v299 = vunpack.c.l.b16 %v211
        %v300 = vunpack.c.l.b16 %v212
        %v301 = vunpack.c.l.b16 %v213
        %v302 = vunpack.c.l.b16 %v214
        %v303 = vunpack.c.l.b16 %v215
        %v304 = vunpack.c.l.b16 %v216
        %v305 = vunpack.c.l.b16 %v217
        %v306 = vunpack.c.l.b16 %v218
        %v307 = vunpack.c.l.b16 %v219
        %v308 = vunpack.c.l.b16 %v220
        %v309 = vunpack.c.l.b16 %v221
        %v310 = vunpack.c.l.b16 %v222
        %v311 = vunpack.c.l.b16 %v223
        %v312 = vunpack.c.l.b16 %v224
        %v313 = vunpack.c.l.b16 %v225
        %v314 = vunpack.c.l.b16 %v226
        %v315 = vunpack.c.l.b16 %v227
        %v316 = vunpack.c.l.b16 %v228
        %v317 = vunpack.c.l.b16 %v229
        %v318 = vunpack.c.l.b16 %v230
        %v319 = vpack.c.b16 %v296, %v295
        %v320 = vpack.c.b16 %v298, %v297
        %v321 = vpack.c.b16 %v300, %v299
        %v322 = vpack.c.b16 %v302, %v301
        %v323 = vpack.c.b16 %v304, %v303
        %v324 = vpack.c.b16 %v306, %v305
        %v325 = vpack.c.b16 %v308, %v307
        %v326 = vpack.c.b16 %v310, %v309
        %v327 = vpack.c.b16 %v312, %v311
        %v328 = vpack.c.b16 %v314, %v313
        %v329 = vpack.c.b16 %v316, %v315
        %v330 = vpack.c.b16 %v318, %v317
        %v359 = vunpack.c.l.b16 %v231
        %v360 = vunpack.c.l.b16 %v232
        %v361 = vunpack.c.l.b16 %v233
        %v362 = vunpack.c.l.b16 %v234
        %v363 = vunpack.c.l.b16 %v235
        %v364 = vunpack.c.l.b16 %v236
        %v365 = vunpack.c.l.b16 %v237
        %v366 = vunpack.c.l.b16 %v238
        %v367 = vunpack.c.l.b16 %v239
        %v368 = vunpack.c.l.b16 %v240
        %v369 = vunpack.c.l.b16 %v241
        %v370 = vunpack.c.l.b16 %v242
        %v371 = vunpack.c.l.b16 %v243
        %v372 = vunpack.c.l.b16 %v244
        %v373 = vunpack.c.l.b16 %v245
        %v374 = vunpack.c.l.b16 %v246
        %v375 = vpack.c.b16 %v360, %v359
        %v376 = vpack.c.b16 %v362, %v361
        %v377 = vpack.c.b16 %v364, %v363
        %v378 = vpack.c.b16 %v366, %v365
        %v379 = vpack.c.b16 %v368, %v367
        %v380 = vpack.c.b16 %v370, %v369
        %v381 = vpack.c.b16 %v372, %v371
        %v382 = vpack.c.b16 %v374, %v373
        %391 = vmatprep.subr.bf16.mxu0 0
        %392 = vmatpush1.bf16.msra.mxu0 %v375
        %393 = vmatprep.subr.bf16.mxu0 0
        %394 = vmatpush1.bf16.msra.mxu0 %v376
        %395 = vmatprep.subr.bf16.mxu0 0
        %396 = vmatpush1.bf16.msra.mxu0 %v377
        %397 = vmatprep.subr.bf16.mxu0 0
        %398 = vmatpush1.bf16.msra.mxu0 %v378
        %399 = vmatprep.subr.bf16.mxu0 0
        %400 = vmatpush1.bf16.msra.mxu0 %v379
        %401 = vmatprep.subr.bf16.mxu0 0
        %402 = vmatpush1.bf16.msra.mxu0 %v380
        %403 = vmatprep.subr.bf16.mxu0 0
        %404 = vmatpush1.bf16.msra.mxu0 %v381
        %405 = vmatprep.subr.bf16.mxu0 0
        %406 = vmatpush1.bf16.msra.mxu0 %v382
        %407 = vmatprep.subr.bf16.mxu0 0
        %408 = vmatpush1.bf16.msra.mxu0 0
        %409 = vmatprep.subr.bf16.mxu0 0
        %410 = vmatpush1.bf16.msra.mxu0 0
        %411 = vmatprep.subr.bf16.mxu0 0
        %412 = vmatpush1.bf16.msra.mxu0 0
        %413 = vmatprep.subr.bf16.mxu0 0
        %414 = vmatpush1.bf16.msra.mxu0 0
        %415 = vmatprep.subr.bf16.mxu0 0
        %416 = vmatpush1.bf16.msra.mxu0 0
        %417 = vmatprep.subr.bf16.mxu0 0
        %418 = vmatpush1.bf16.msra.mxu0 0
        %419 = vmatprep.subr.bf16.mxu0 0
        %420 = vmatpush1.bf16.msra.mxu0 0
        %421 = vmatprep.subr.bf16.mxu0 0
        %422 = vmatpush1.bf16.msra.mxu0 0
        %423 = vmatprep.mubr.bf16.mxu0 0
        %424 = vmatmul.mubr.bf16.gmra.mrb[0].mxu0 %v319
        %v425 = vpop.f32.mrb[0].mxu0
        %v426 = vadd.f32 %v247, %v425
        %v427 = vpop.f32.mrb[0].mxu0
        %v428 = vpop.f32.mrb[0].mxu0
        %v429 = vadd.f32 %v248, %v428
        %v430 = vpop.f32.mrb[0].mxu0
        %431 = vmatprep.mubr.bf16.mxu0 0
        %432 = vmatmul.mubr.bf16.gmra.mrb[0].mxu0 %v320
        %v433 = vpop.f32.mrb[0].mxu0
        %v434 = vadd.f32 %v249, %v433
        %v435 = vpop.f32.mrb[0].mxu0
        %v436 = vpop.f32.mrb[0].mxu0
        %v437 = vadd.f32 %v250, %v436
        %v438 = vpop.f32.mrb[0].mxu0
        %439 = vmatprep.mubr.bf16.mxu0 0
        %440 = vmatmul.mubr.bf16.gmra.mrb[0].mxu0 %v321
        %v441 = vpop.f32.mrb[0].mxu0
        %v442 = vadd.f32 %v251, %v441
        %v443 = vpop.f32.mrb[0].mxu0
        %v444 = vpop.f32.mrb[0].mxu0
        %v445 = vadd.f32 %v252, %v444
        %v446 = vpop.f32.mrb[0].mxu0
        %447 = vmatprep.mubr.bf16.mxu0 0
        %448 = vmatmul.mubr.bf16.gmra.mrb[0].mxu0 %v322
        %v449 = vpop.f32.mrb[0].mxu0
        %v450 = vadd.f32 %v253, %v449
        %v451 = vpop.f32.mrb[0].mxu0
        %v452 = vpop.f32.mrb[0].mxu0
        %v453 = vadd.f32 %v254, %v452
        %v454 = vpop.f32.mrb[0].mxu0
        %455 = vmatprep.mubr.bf16.mxu0 0
        %456 = vmatmul.mubr.bf16.gmra.mrb[0].mxu0 %v323
        %v457 = vpop.f32.mrb[0].mxu0
        %v458 = vadd.f32 %v255, %v457
        %v459 = vpop.f32.mrb[0].mxu0
        %v460 = vpop.f32.mrb[0].mxu0
        %v461 = vadd.f32 %v256, %v460
        %v462 = vpop.f32.mrb[0].mxu0
        %463 = vmatprep.mubr.bf16.mxu0 0
        %464 = vmatmul.mubr.bf16.gmra.mrb[0].mxu0 %v324
        %v465 = vpop.f32.mrb[0].mxu0
        %v466 = vadd.f32 %v257, %v465
        %v467 = vpop.f32.mrb[0].mxu0
        %v468 = vpop.f32.mrb[0].mxu0
        %v469 = vadd.f32 %v258, %v468
        %v470 = vpop.f32.mrb[0].mxu0
        %471 = vmatprep.mubr.bf16.mxu0 0
        %472 = vmatmul.mubr.bf16.gmra.mrb[0].mxu0 %v325
        %v473 = vpop.f32.mrb[0].mxu0
        %v474 = vadd.f32 %v259, %v473
        %v475 = vpop.f32.mrb[0].mxu0
        %v476 = vpop.f32.mrb[0].mxu0
        %v477 = vadd.f32 %v260, %v476
        %v478 = vpop.f32.mrb[0].mxu0
        %479 = vmatprep.mubr.bf16.mxu0 0
        %480 = vmatmul.mubr.bf16.gmra.mrb[0].mxu0 %v326
        %v481 = vpop.f32.mrb[0].mxu0
        %v482 = vadd.f32 %v261, %v481
        %v483 = vpop.f32.mrb[0].mxu0
        %v484 = vpop.f32.mrb[0].mxu0
        %v485 = vadd.f32 %v262, %v484
        %v486 = vpop.f32.mrb[0].mxu0
        %487 = vmatprep.mubr.bf16.mxu0 0
        %488 = vmatmul.mubr.bf16.gmra.mrb[0].mxu0 %v327
        %v489 = vpop.f32.mrb[0].mxu0
        %v490 = vadd.f32 %v263, %v489
        %v491 = vpop.f32.mrb[0].mxu0
        %v492 = vpop.f32.mrb[0].mxu0
        %v493 = vadd.f32 %v264, %v492
        %v494 = vpop.f32.mrb[0].mxu0
        %495 = vmatprep.mubr.bf16.mxu0 0
        %496 = vmatmul.mubr.bf16.gmra.mrb[0].mxu0 %v328
        %v497 = vpop.f32.mrb[0].mxu0
        %v498 = vadd.f32 %v265, %v497
        %v499 = vpop.f32.mrb[0].mxu0
        %v500 = vpop.f32.mrb[0].mxu0
        %v501 = vadd.f32 %v266, %v500
        %v502 = vpop.f32.mrb[0].mxu0
        %503 = vmatprep.mubr.bf16.mxu0 0
        %504 = vmatmul.mubr.bf16.gmra.mrb[0].mxu0 %v329
        %v505 = vpop.f32.mrb[0].mxu0
        %v506 = vadd.f32 %v267, %v505
        %v507 = vpop.f32.mrb[0].mxu0
        %v508 = vpop.f32.mrb[0].mxu0
        %v509 = vadd.f32 %v268, %v508
        %v510 = vpop.f32.mrb[0].mxu0
        %511 = vmatprep.mubr.bf16.mxu0 0
        %512 = vmatmul.mubr.bf16.gmra.mrb[0].mxu0 %v330
        %v513 = vpop.f32.mrb[0].mxu0
        %v514 = vadd.f32 %v269, %v513
        %v515 = vpop.f32.mrb[0].mxu0
        %v516 = vpop.f32.mrb[0].mxu0
        %v517 = vadd.f32 %v270, %v516
        %v518 = vpop.f32.mrb[0].mxu0
        %519 = vdwg.mxu0
        %v520 = vld [vmem:[%s2] sm:$0x1]
        %v522 = vlaneseq
        %v523 = vshrl.u32 %v522, 7
        %v524 = vsub.s32 0, %v523
        %v525 = vrot.slane %v520, %v524
        %v527 = vadd.f32 %v426, %v525
        %v528 = vadd.f32 %v429, %v525
        %v529 = vadd.f32 %v434, %v525
        %v530 = vadd.f32 %v437, %v525
        %v531 = vadd.f32 %v442, %v525
        %v532 = vadd.f32 %v445, %v525
        %v533 = vadd.f32 %v450, %v525
        %v534 = vadd.f32 %v453, %v525
        %v535 = vadd.f32 %v458, %v525
        %v536 = vadd.f32 %v461, %v525
        %v537 = vadd.f32 %v466, %v525
        %v538 = vadd.f32 %v469, %v525
        %v539 = vadd.f32 %v474, %v525
        %v540 = vadd.f32 %v477, %v525
        %v541 = vadd.f32 %v482, %v525
        %v542 = vadd.f32 %v485, %v525
        %v543 = vadd.f32 %v490, %v525
        %v544 = vadd.f32 %v493, %v525
        %v545 = vadd.f32 %v498, %v525
        %v546 = vadd.f32 %v501, %v525
        %v547 = vadd.f32 %v506, %v525
        %v548 = vadd.f32 %v509, %v525
        %v549 = vadd.f32 %v514, %v525
        %v550 = vadd.f32 %v517, %v525
        %551 = vst [vmem:[%s203] sm:$0xff] %v527
        %552 = vst [vmem:[%s203 + $0x8] sm:$0xff] %v528
        %553 = vst [vmem:[%s203 + $0x10] sm:$0xff] %v529
        %554 = vst [vmem:[%s203 + $0x18] sm:$0xff] %v530
        %555 = vst [vmem:[%s203 + $0x20] sm:$0xff] %v531
        %556 = vst [vmem:[%s203 + $0x28] sm:$0xff] %v532
        %557 = vst [vmem:[%s203 + $0x30] sm:$0xff] %v533
        %558 = vst [vmem:[%s203 + $0x38] sm:$0xff] %v534
        %559 = vst [vmem:[%s203 + $0x40] sm:$0xff] %v535
        %560 = vst [vmem:[%s203 + $0x48] sm:$0xff] %v536
        %561 = vst [vmem:[%s203 + $0x50] sm:$0xff] %v537
        %562 = vst [vmem:[%s203 + $0x58] sm:$0xff] %v538
        %563 = vst [vmem:[%s203 + $0x60] sm:$0xff] %v539
        %564 = vst [vmem:[%s203 + $0x68] sm:$0xff] %v540
        %565 = vst [vmem:[%s203 + $0x70] sm:$0xff] %v541
        %566 = vst [vmem:[%s203 + $0x78] sm:$0xff] %v542
        %567 = vst [vmem:[%s203 + $0x80] sm:$0xff] %v543
        %568 = vst [vmem:[%s203 + $0x88] sm:$0xff] %v544
        %569 = vst [vmem:[%s203 + $0x90] sm:$0xff] %v545
        %570 = vst [vmem:[%s203 + $0x98] sm:$0xff] %v546
        %571 = vst [vmem:[%s203 + $0xa0] sm:$0xff] %v547
        %572 = vst [vmem:[%s203 + $0xa8] sm:$0xff] %v548
        %573 = vst [vmem:[%s203 + $0xb0] sm:$0xff] %v549
        %574 = vst [vmem:[%s203 + $0xb8] sm:$0xff] %v550
        %s575 = sand.u32 %s97, 1
        %s576 = scalar_lea.sflag [#allocation4], %s575
        %s577 = sand.u32 %s97, 1
        %s578 = smul.addr %s577, 192
        %s579 = scalar_lea.vmem [#allocation7], %s578
        // Predicated region
        $region41: #{tpu_custom_call.1} parent=31 // pred_check
          %p580 = pneg %p107
        $region42: #{tpu_custom_call.1} parent=31 // pred_check_branch
          %582 = sbr.rel (%p580) target = $region44
        $region43: #{tpu_custom_call.1} parent=31 // pred_region
          %s583 = smul.u32 24, %s21
          %s585 = ssub.s32 3072, 3072
          %586 = vsyncadd %s576, %s585
          %s587 = smul.addr %s583, 128
          %s588 = scalar_lea.hbm %s3, %s587
          %s589 = sshll.u32 %s579, 4
          %s590 = int_to_ptr.vmem [resolvable:$true] %s589
          %595 = dma.vmem_to_hbm [thread:$0]  %s590, 3072, %s588, %s576, 128, 128, 8
        $region44: #{tpu_custom_call.1} parent=31 // pred_fallthru
          _
      $region32: #{tpu_custom_call.1} parent=5 // pred_fallthru
        _
      %p596 = scmp.le.s32.totalorder 2, %s16
      // Predicated region
      $region45: #{tpu_custom_call.1} parent=5 // pred_check
        %p597 = pneg %p596
      $region46: #{tpu_custom_call.1} parent=5 // pred_check_branch
        %599 = sbr.rel (%p597) target = $region48
      $region47: #{tpu_custom_call.1} parent=5 // pred_region
        %s600 = ssub.s32 %s16, 2
        // Predicated region
        $region49: #{tpu_custom_call.1} parent=47 // pred_check
          %p601 = pneg %p113
        $region50: #{tpu_custom_call.1} parent=47 // pred_check_branch
          %603 = sbr.rel (%p601) target = $region52
        $region51: #{tpu_custom_call.1} parent=47 // pred_region
          %s604 = sand.u32 %s98, 1
          %s605 = scalar_lea.sflag [#allocation4], %s604
          %s606 = sand.u32 %s98, 1
          %s607 = smul.addr %s606, 192
          %s608 = scalar_lea.vmem [#allocation7], %s607
          %609 = dma.done %s605, 3072
        $region52: #{tpu_custom_call.1} parent=47 // pred_fallthru
          _
      $region48: #{tpu_custom_call.1} parent=5 // pred_fallthru
        _
    $region6: #{tpu_custom_call.1} parent=1 // loop_footer
      %s20 = sadd.s32 1, %s16
    $region7: #{tpu_custom_call.1} parent=1 // loop_footer_branch
      %15 = sbr.rel target = $region3
    $region8: #{tpu_custom_call.1} parent=1 // loop_exit
      _
    %610 = vsyncpa [#allocation3], 1
    %s611 = scalar_lea.sflag [#allocation3], 1
    %612 = vsyncpa %s611, 1
    %613 = vsyncpa [#allocation6], 1
    %614 = vsyncpa [#allocation4], 1
    %s615 = scalar_lea.sflag [#allocation4], 1
    %616 = vsyncpa %s615, 1

</llo_original>
